<compile_context>
chip_gen: v7x
topology: tpu7x:2x2x1
jax: 0.10.0
libtpu: 0.0.40
codegen_flags: <defaults>
</compile_context>

<pallas_src>
import jax
import jax.numpy as jnp
from jax.experimental import pallas as pl
from jax.experimental.pallas import tpu as pltpu

_MV_DIM = 16
# Non-degenerate PGA blades (no e0 factor) used by the GATR inner product.
_INNER_PRODUCT_IDX = (0, 2, 3, 4, 8, 9, 10, 14)


def _equi_norm_kernel(x_ref, o_ref):
    x = x_ref[...].astype(jnp.float32)                 # (tr, C*16)
    feat = x.shape[-1]
    n_channels = feat // _MV_DIM

    # Lane mask selecting the non-degenerate multivector components.
    comp = jax.lax.broadcasted_iota(jnp.int32, (1, feat), 1) % _MV_DIM
    mask = comp == _INNER_PRODUCT_IDX[0]
    for idx in _INNER_PRODUCT_IDX[1:]:
        mask = mask | (comp == idx)

    masked = jnp.where(mask, x, 0.0)
    sumsq = jnp.sum(masked * x, axis=-1, keepdims=True)      # (tr, 1)
    mean_sq = sumsq * (1.0 / n_channels)                     # mean over channel dim
    inv = 1.0 / jnp.sqrt(mean_sq)                            # no eps, per spec
    o_ref[...] = (x * inv).astype(o_ref.dtype)


def _sublane_multiple(dtype) -> int:
    # 8 for f32, 16 for bf16, 32 for int8 / fp8 (sublane packing).
    return max(8, 32 // jnp.dtype(dtype).itemsize)


def equilinear_norm(x, *, target_block_bytes=4 * 1024 * 1024):
    """EquilinearNormLayer.forward for x of shape [..., channels, 16]."""
    if x.shape[-1] != _MV_DIM:
        raise ValueError(f"last dim must be {_MV_DIM}, got {x.shape[-1]}")
    orig_shape = x.shape
    channels = orig_shape[-2]
    feat = channels * _MV_DIM
    rows = 1
    for s in orig_shape[:-2]:
        rows *= s
    x2 = x.reshape(rows, feat)

    # Dtype-aware sublane-multiple row tile, sized to ~4 MiB per buffer
    # (2 in + 2 out double-buffers ≈ 16 MiB, safe on v5e/v6e/v7x).
    sub = _sublane_multiple(x.dtype)
    bytes_per_row = feat * jnp.dtype(x.dtype).itemsize
    tr = max(sub, (target_block_bytes // bytes_per_row) // sub * sub)
    tr = min(tr, pl.cdiv(rows, sub) * sub)
    grid = (pl.cdiv(rows, tr),)          # partial last block handled by Pallas

    out = pl.pallas_call(
        _equi_norm_kernel,
        out_shape=jax.ShapeDtypeStruct((rows, feat), x.dtype),
        grid=grid,
        in_specs=[pl.BlockSpec((tr, feat), lambda i: (i, 0))],
        out_specs=pl.BlockSpec((tr, feat), lambda i: (i, 0)),
        compiler_params=pltpu.CompilerParams(
            dimension_semantics=("parallel",),
            vmem_limit_bytes=48 * 1024 * 1024,
        ),
    )(x2)
    return out.reshape(orig_shape)


def _reference(x):
    idx = jnp.asarray(_INNER_PRODUCT_IDX)
    sel = x[..., idx]
    ip = jnp.sum(sel * sel, axis=-1, keepdims=True)       # faster_inner_product(x, x)
    sq = jnp.mean(ip, axis=-2, keepdims=True)             # mean over channel dim
    return x / jnp.sqrt(sq)


if __name__ == "__main__":
    key = jax.random.PRNGKey(0)
    # (batch=2, seq=8, channels=8, mv=16) multivector tensor -> lane dim 128.
    x = jax.random.normal(key, (2, 8, 8, 16), dtype=jnp.float32)

    y = jax.block_until_ready(equilinear_norm(x))

    ref = _reference(x)
    assert y.shape == x.shape
    assert jnp.allclose(y, ref, atol=1e-5, rtol=1e-5), "mismatch vs reference"

    print("KERNEL_OK")
</pallas_src>

<mosaic_0001>
module attributes {stable_mosaic.version = 11 : i64} {
  func.func @_equi_norm_kernel(%arg0: i32, %arg1: memref<16x128xf32, #tpu.memory_space<vmem>>, %arg2: memref<16x128xf32, #tpu.memory_space<vmem>>) attributes {dimension_semantics = [#tpu.dimension_semantics<parallel>], iteration_bounds = array<i64: 1>, scalar_prefetch = 0 : i64, scratch_operands = 0 : i64, tpu.core_type = #tpu.core_type<tc>, window_params = [{transform_indices = @transform_0, window_bounds = array<i64: 16, 128>}, {transform_indices = @transform_1, window_bounds = array<i64: 16, 128>}]} {
    %c0 = arith.constant 0 : index
    %c0_0 = arith.constant 0 : index
    %0 = vector.load %arg1[%c0, %c0_0] : memref<16x128xf32, #tpu.memory_space<vmem>>, vector<16x128xf32>
    %1 = tpu.iota {dimensions = array<i32: 1>} : vector<1x128xi32>
    %c16_i32 = arith.constant 16 : i32
    %c0_i32 = arith.constant 0 : i32
    %2 = arith.cmpi eq, %c16_i32, %c0_i32 : i32
    %c1_i32 = arith.constant 1 : i32
    %3 = arith.select %2, %c1_i32, %c16_i32 : i32
    %4 = vector.broadcast %3 : i32 to vector<1x128xi32>
    %5 = arith.remsi %1, %4 : vector<1x128xi32>
    %c0_i32_1 = arith.constant 0 : i32
    %6 = vector.broadcast %c0_i32_1 : i32 to vector<1x128xi32>
    %7 = arith.cmpi ne, %5, %6 : vector<1x128xi32>
    %c0_i32_2 = arith.constant 0 : i32
    %8 = vector.broadcast %c0_i32_2 : i32 to vector<1x128xi32>
    %9 = arith.cmpi slt, %5, %8 : vector<1x128xi32>
    %c0_i32_3 = arith.constant 0 : i32
    %10 = arith.cmpi slt, %3, %c0_i32_3 : i32
    %11 = vector.broadcast %10 : i1 to vector<1x128xi1>
    %12 = vector.broadcast %11 : vector<1x128xi1> to vector<1x128xi1>
    %13 = arith.xori %9, %12 : vector<1x128xi1>
    %14 = arith.andi %13, %7 : vector<1x128xi1>
    %15 = vector.broadcast %3 : i32 to vector<1x128xi32>
    %16 = arith.addi %5, %15 : vector<1x128xi32>
    %17 = arith.select %14, %16, %5 : vector<1x128xi1>, vector<1x128xi32>
    %c0_i32_4 = arith.constant 0 : i32
    %18 = vector.broadcast %c0_i32_4 : i32 to vector<1x128xi32>
    %19 = arith.cmpi eq, %17, %18 : vector<1x128xi32>
    %c2_i32 = arith.constant 2 : i32
    %20 = vector.broadcast %c2_i32 : i32 to vector<1x128xi32>
    %21 = arith.cmpi eq, %17, %20 : vector<1x128xi32>
    %22 = arith.ori %19, %21 : vector<1x128xi1>
    %c3_i32 = arith.constant 3 : i32
    %23 = vector.broadcast %c3_i32 : i32 to vector<1x128xi32>
    %24 = arith.cmpi eq, %17, %23 : vector<1x128xi32>
    %25 = arith.ori %22, %24 : vector<1x128xi1>
    %c4_i32 = arith.constant 4 : i32
    %26 = vector.broadcast %c4_i32 : i32 to vector<1x128xi32>
    %27 = arith.cmpi eq, %17, %26 : vector<1x128xi32>
    %28 = arith.ori %25, %27 : vector<1x128xi1>
    %c8_i32 = arith.constant 8 : i32
    %29 = vector.broadcast %c8_i32 : i32 to vector<1x128xi32>
    %30 = arith.cmpi eq, %17, %29 : vector<1x128xi32>
    %31 = arith.ori %28, %30 : vector<1x128xi1>
    %c9_i32 = arith.constant 9 : i32
    %32 = vector.broadcast %c9_i32 : i32 to vector<1x128xi32>
    %33 = arith.cmpi eq, %17, %32 : vector<1x128xi32>
    %34 = arith.ori %31, %33 : vector<1x128xi1>
    %c10_i32 = arith.constant 10 : i32
    %35 = vector.broadcast %c10_i32 : i32 to vector<1x128xi32>
    %36 = arith.cmpi eq, %17, %35 : vector<1x128xi32>
    %37 = arith.ori %34, %36 : vector<1x128xi1>
    %c14_i32 = arith.constant 14 : i32
    %38 = vector.broadcast %c14_i32 : i32 to vector<1x128xi32>
    %39 = arith.cmpi eq, %17, %38 : vector<1x128xi32>
    %40 = arith.ori %37, %39 : vector<1x128xi1>
    %cst = arith.constant 0.000000e+00 : f32
    %41 = vector.shape_cast %40 : vector<1x128xi1> to vector<1x128xi1>
    %42 = vector.broadcast %41 : vector<1x128xi1> to vector<16x128xi1>
    %43 = vector.broadcast %cst : f32 to vector<16x128xf32>
    %44 = arith.select %42, %0, %43 : vector<16x128xi1>, vector<16x128xf32>
    %45 = arith.mulf %44, %0 : vector<16x128xf32>
    %cst_5 = arith.constant dense<0.000000e+00> : vector<16xf32>
    %46 = vector.multi_reduction <add>, %45, %cst_5 [1] : vector<16x128xf32> to vector<16xf32>
    %47 = vector.shape_cast %46 : vector<16xf32> to vector<16x1xf32>
    %cst_6 = arith.constant 1.250000e-01 : f32
    %48 = vector.broadcast %cst_6 : f32 to vector<16x1xf32>
    %49 = arith.mulf %47, %48 : vector<16x1xf32>
    %50 = math.sqrt %49 : vector<16x1xf32>
    %cst_7 = arith.constant 1.000000e+00 : f32
    %51 = vector.broadcast %cst_7 : f32 to vector<16x1xf32>
    %52 = arith.divf %51, %50 : vector<16x1xf32>
    %53 = vector.broadcast %52 : vector<16x1xf32> to vector<16x128xf32>
    %54 = arith.mulf %0, %53 : vector<16x128xf32>
    %c0_8 = arith.constant 0 : index
    %c0_9 = arith.constant 0 : index
    %55 = vector.load %arg2[%c0_8, %c0_9] : memref<16x128xf32, #tpu.memory_space<vmem>>, vector<16x128xf32>
    tpu.vector_store %arg2[%c0_8, %c0_9], %54 {strides = array<i32>} : memref<16x128xf32, #tpu.memory_space<vmem>>, vector<16x128xf32>,
    return
  }
  func.func @transform_0(%arg0: i32) -> (i32, i32) {
    %c0_i32 = arith.constant 0 : i32
    %c0_i32_0 = arith.constant 0 : i32
    return %arg0, %c0_i32 : i32, i32
  }
  func.func @transform_1(%arg0: i32) -> (i32, i32) {
    %c0_i32 = arith.constant 0 : i32
    %c0_i32_0 = arith.constant 0 : i32
    return %arg0, %c0_i32 : i32, i32
  }
}

</mosaic_0001>

<llo_original>
// kernel: tpu_custom_call.1
$region0: #{tpu_custom_call.1}
  #allocation0 [shape = 'u32[]', space=smem, size = 0x4, offset = 0x4, fixed_abs, tag = 'smem constant byte address 0x4 - core index']
  #allocation1 [shape = 'u32[144,128]{1,0:T(1,128)}', space=vmem, size = 0x12000, scoped, tag = 'internal scratch']
  %s0 = inlined_call_operand.hbm [shape: f32[16,128], index: 0, kind: input, shape index: {}]
  %s1 = inlined_call_operand.hbm [shape: f32[16,128], index: 1, kind: output, shape index: {}]
  %s2 = sld [smem:[#allocation0]]
  $region18: #{tpu_custom_call.1} parent=0
    _
  %s4 = ssub.s32 1, %s2
  %s5 = scalar_select 0, %s4, %s2
  $region1: #{tpu_custom_call.1} parent=0
    #allocation2 [shape = 'u8[8192]{0}', space=vmem, size = 0x2000, scoped, tag = 'input window, operand 0, single buffered']
    #allocation3 [shape = 's32[1]{0}', space=sflag, size = 0x4, scoped, tag = 'scoped memory for tpu_custom_call.1']
    #allocation4 [shape = 's32[1]{0}', space=sflag, size = 0x4, scoped, tag = 'scoped memory for tpu_custom_call.1']
    #allocation5 [shape = 'u8[8192]{0}', space=vmem, size = 0x2000, scoped, tag = 'output window, operand 0, single buffered']
    %6 = vsyncpa [#allocation3], 0
    %7 = vsyncpa [#allocation4], 0
    // Predicated region
    $region2: #{tpu_custom_call.1} parent=1 // pred_check
      _
    $region3: #{tpu_custom_call.1} parent=1 // pred_check_branch
      %9 = sbr.rel (0) target = $region5
    $region4: #{tpu_custom_call.1} parent=1 // pred_region
      %s11 = ssub.s32 256, 256
      %12 = vsyncadd [#allocation3], %s11
      %s13 = sshll.u32 [#allocation2], 4
      %s14 = int_to_ptr.vmem [resolvable:$true] %s13
      %19 = dma.hbm_to_vmem [thread:$0]  %s0, 256, %s14, [#allocation3], 128, 128, 8
    $region5: #{tpu_custom_call.1} parent=1 // pred_fallthru
      _
    // Predicated region
    $region6: #{tpu_custom_call.1} parent=1 // pred_check
      _
    $region7: #{tpu_custom_call.1} parent=1 // pred_check_branch
      %21 = sbr.rel (0) target = $region9
    $region8: #{tpu_custom_call.1} parent=1 // pred_region
      %22 = dma.done [#allocation3], 256
    $region9: #{tpu_custom_call.1} parent=1 // pred_fallthru
      _
    %v23 = vld [vmem:[#allocation2] sm:$0xff]
    %v24 = vld [vmem:[#allocation2 + $0x8] sm:$0xff]
    %v25 = vlaneseq
    %v26 = vand.u32 %v25, 127
    %vm27 = vcmp.lt.s32.totalorder %v26, 0
    %v28 = vsub.s32 0, %v26
    %v29 = vsel %vm27, %v28, %v26
    %v30 = vshrl.u32 %v29, 4
    %v31 = vand.u32 %v29, 15
    %v32 = vsub.s32 0, %v31
    %v33 = vsel %vm27, %v32, %v31
    %vm34 = vcmp.ne.s32.totalorder %v33, 0
    %vm35 = vcmp.lt.s32.totalorder %v33, 0
    %vm36 = vmand %vm35, %vm34
    %v37 = vadd.s32 %v33, 16
    %v38 = vsel %vm36, %v37, %v33
    %vm39 = vcmp.eq.s32.totalorder %v38, 0
    %vm40 = vcmp.eq.s32.totalorder %v38, 2
    %vm41 = vmor %vm39, %vm40
    %vm42 = vcmp.eq.s32.totalorder %v38, 3
    %vm43 = vmor %vm41, %vm42
    %vm44 = vcmp.eq.s32.totalorder %v38, 4
    %vm45 = vmor %vm43, %vm44
    %vm46 = vcmp.eq.s32.totalorder %v38, 8
    %vm47 = vmor %vm45, %vm46
    %vm48 = vcmp.eq.s32.totalorder %v38, 9
    %vm49 = vmor %vm47, %vm48
    %vm50 = vcmp.eq.s32.totalorder %v38, 10
    %vm51 = vmor %vm49, %vm50
    %vm52 = vcmp.eq.s32.totalorder %v38, 14
    %vm53 = vmor %vm51, %vm52
    %v54 = vsel %vm53, 1, 0
    %vm55 = vcmp.eq.s32.totalorder %v54, 1
    %v56 = vsel %vm55, %v23, 0.0
    %v57 = vsel %vm55, %v24, 0.0
    %v58 = vmul.f32 %v56, %v23
    %v59 = vmul.f32 %v57, %v24
    %60 = vadd.xlane.f32.xlu0 %v58
    %v61 = vpop.xlane.xlu0 %60
    %62 = vadd.xlane.f32.xlu0 %v59
    %v63 = vpop.xlane.xlu0 %62
    %v64 = vmul.f32 %v61, 0.125
    %v65 = vmul.f32 %v63, 0.125
    %v66 = vrsqrt.pop %v64
    %v67 = vmul.f32 %v64, %v66
    %vm68 = vcmp.eq.f32.partialorder %v64, inf
    %v69 = vsel %vm68, %v64, %v67
    %vm70 = vcmp.eq.f32.partialorder %v64, 0.0
    %v71 = vand.u32 %v64, 2147483648
    %v72 = vsel %vm70, %v71, %v69
    %v73 = vrsqrt.pop %v65
    %v74 = vmul.f32 %v65, %v73
    %vm75 = vcmp.eq.f32.partialorder %v65, inf
    %v76 = vsel %vm75, %v65, %v74
    %vm77 = vcmp.eq.f32.partialorder %v65, 0.0
    %v78 = vand.u32 %v65, 2147483648
    %v79 = vsel %vm77, %v78, %v76
    %v80 = vrcp.pop %v72
    %v81 = vmul.f32 1.0, %v80
    %v82 = vrcp.pop %v79
    %v83 = vmul.f32 1.0, %v82
    %v84 = vmul.f32 %v23, %v81
    %v85 = vmul.f32 %v24, %v83
    %86 = vst [vmem:[#allocation5] sm:$0xff] %v84
    %87 = vst [vmem:[#allocation5 + $0x8] sm:$0xff] %v85
    // Predicated region
    $region10: #{tpu_custom_call.1} parent=1 // pred_check
      _
    $region11: #{tpu_custom_call.1} parent=1 // pred_check_branch
      %89 = sbr.rel (0) target = $region13
    $region12: #{tpu_custom_call.1} parent=1 // pred_region
      %s91 = ssub.s32 256, 256
      %92 = vsyncadd [#allocation4], %s91
      %s93 = sshll.u32 [#allocation5], 4
      %s94 = int_to_ptr.vmem [resolvable:$true] %s93
      %99 = dma.vmem_to_hbm [thread:$0]  %s94, 256, %s1, [#allocation4], 128, 128, 8
    $region13: #{tpu_custom_call.1} parent=1 // pred_fallthru
      _
    // Predicated region
    $region14: #{tpu_custom_call.1} parent=1 // pred_check
      _
    $region15: #{tpu_custom_call.1} parent=1 // pred_check_branch
      %101 = sbr.rel (0) target = $region17
    $region16: #{tpu_custom_call.1} parent=1 // pred_region
      %102 = dma.done [#allocation4], 256
    $region17: #{tpu_custom_call.1} parent=1 // pred_fallthru
      _
    %103 = vsyncpa [#allocation3], 1
    %104 = vsyncpa [#allocation4], 1

</llo_original>
